<compile_context>
chip_gen: v7x
topology: tpu7x:2x2x1
jax: 0.10.0
libtpu: 0.0.40
codegen_flags: <defaults>
</compile_context>

<pallas_src>
import jax
import jax.numpy as jnp
from jax.experimental import pallas as pl
from jax.experimental.pallas import tpu as pltpu


NEG_SLOPE = 0.01  # F.leaky_relu default
LANE = 128


def _leaky_relu(x):
    return jnp.where(x > 0, x, NEG_SLOPE * x)


def _round_up(n, m):
    return ((n + m - 1) // m) * m


def _pad2(a, rows, cols):
    r, c = a.shape
    return jnp.pad(a, ((0, rows - r), (0, cols - c)))


def munet_kernel(x_ref, w1_ref, b1_ref, w2_ref, b2_ref, w3_ref, b3_ref, mu_ref):
    # fc1 + leaky_relu  (bf16 MXU matmul, f32 accumulate + elementwise)
    h = jnp.dot(x_ref[...], w1_ref[...], preferred_element_type=jnp.float32)
    h = _leaky_relu(h + b1_ref[...])

    # fc2 + leaky_relu  (hidden padded 64 -> 128; padded lanes stay exactly 0)
    h = jnp.dot(h.astype(jnp.bfloat16), w2_ref[...],
                preferred_element_type=jnp.float32)
    h = _leaky_relu(h + b2_ref[...])

    # fc_mu + leaky_relu  (this is the "MU pre_activation" the torch code prints)
    pre = jnp.dot(h.astype(jnp.bfloat16), w3_ref[...],
                  preferred_element_type=jnp.float32)
    pre = _leaky_relu(pre + b3_ref[...])
    # TODO(synk): torch prints the pre-activation tensor here; logging omitted
    # (could use pl.debug_print in interpret mode).

    # sigmoid via EUP exp + EUP approximate reciprocal (lane-dense 128-wide store)
    mu_ref[...] = pl.reciprocal(1.0 + jnp.exp(-pre), approx=True).astype(mu_ref.dtype)


def munet_forward(x, params, *, tile_b=256):
    """x: (B, S) float32; params: dict of pre-transposed (in, out) weights."""
    B, S = x.shape
    H1 = params["w1"].shape[1]            # 128
    H2 = params["w2"].shape[1]            # 64
    A = params["w3"].shape[1]             # action_dim
    H2P = _round_up(H2, LANE)             # 128
    AP = _round_up(A, LANE)               # 128

    # Zero-pad weights/biases to lane-dense widths; bf16 for MXU, f32 biases.
    w1 = params["w1"].astype(jnp.bfloat16)                     # (S, 128)
    b1 = params["b1"].astype(jnp.float32)                      # (1, 128)
    w2 = _pad2(params["w2"], H1, H2P).astype(jnp.bfloat16)     # (128, 128)
    b2 = _pad2(params["b2"], 1, H2P).astype(jnp.float32)       # (1, 128)
    w3 = _pad2(params["w3"], H2P, AP).astype(jnp.bfloat16)     # (128, 128)
    b3 = _pad2(params["b3"], 1, AP).astype(jnp.float32)        # (1, 128)

    # Pad the batch to a full row tile (>= one bf16 sublane group of 16 rows).
    tile_b = max(16, min(tile_b, _round_up(B, 16)))
    Bp = _round_up(B, tile_b)
    xp = jnp.pad(x, ((0, Bp - B), (0, 0))).astype(jnp.bfloat16)

    grid = (Bp // tile_b,)

    def pinned(a):  # weights/biases: same block every step -> stay VMEM-resident
        return pl.BlockSpec(a.shape, lambda i: (0, 0), memory_space=pltpu.VMEM)

    out = pl.pallas_call(
        munet_kernel,
        out_shape=jax.ShapeDtypeStruct((Bp, AP), jnp.float32),
        grid=grid,
        in_specs=[
            pl.BlockSpec((tile_b, S), lambda i: (i, 0), memory_space=pltpu.VMEM),
            pinned(w1), pinned(b1), pinned(w2), pinned(b2), pinned(w3), pinned(b3),
        ],
        out_specs=pl.BlockSpec((tile_b, AP), lambda i: (i, 0),
                               memory_space=pltpu.VMEM),
        compiler_params=pltpu.CompilerParams(
            dimension_semantics=("parallel",)),
    )(xp, w1, b1, w2, b2, w3, b3)

    return out[:B, :A]


def init_params(key, state_dim, action_dim):
    """Mimic nn.Linear default init: U(-1/sqrt(in), 1/sqrt(in)).
    Weights stored as (in, out) — i.e. already transposed vs torch's (out, in)."""
    def linear(k, fan_in, fan_out):
        kw, kb = jax.random.split(k)
        bound = 1.0 / jnp.sqrt(fan_in)
        w = jax.random.uniform(kw, (fan_in, fan_out), jnp.float32, -bound, bound)
        b = jax.random.uniform(kb, (1, fan_out), jnp.float32, -bound, bound)
        return w, b

    k1, k2, k3 = jax.random.split(key, 3)
    w1, b1 = linear(k1, state_dim, 128)
    w2, b2 = linear(k2, 128, 64)
    w3, b3 = linear(k3, 64, action_dim)
    return {"w1": w1, "b1": b1, "w2": w2, "b2": b2, "w3": w3, "b3": b3}


def munet_reference(x, p):
    """Pure-JAX f32 reference for correctness check."""
    h = _leaky_relu(x @ p["w1"] + p["b1"])
    h = _leaky_relu(h @ p["w2"] + p["b2"])
    pre = _leaky_relu(h @ p["w3"] + p["b3"])
    return jax.nn.sigmoid(pre)


if __name__ == "__main__":
    key = jax.random.PRNGKey(0)
    k_param, k_x = jax.random.split(key)

    batch = 2
    state_space_size = 16
    action_space_size = 4

    params = init_params(k_param, state_space_size, action_space_size)
    x = jax.random.normal(k_x, (batch, state_space_size), jnp.float32)

    mu = munet_forward(x, params)
    mu = jax.block_until_ready(mu)

    ref = munet_reference(x, params)
    assert mu.shape == (batch, action_space_size)
    # bf16 MXU inputs + approximate reciprocal => loose (but tight enough) tolerance.
    assert jnp.allclose(mu, ref, atol=2e-2, rtol=2e-2), "mismatch vs reference"

    print("KERNEL_OK")
</pallas_src>

<mosaic_0001>
module attributes {stable_mosaic.version = 11 : i64} {
  func.func @munet_kernel(%arg0: i32, %arg1: memref<16x16xbf16, #tpu.memory_space<vmem>>, %arg2: memref<16x128xbf16, #tpu.memory_space<vmem>>, %arg3: memref<1x128xf32, #tpu.memory_space<vmem>>, %arg4: memref<128x128xbf16, #tpu.memory_space<vmem>>, %arg5: memref<1x128xf32, #tpu.memory_space<vmem>>, %arg6: memref<128x128xbf16, #tpu.memory_space<vmem>>, %arg7: memref<1x128xf32, #tpu.memory_space<vmem>>, %arg8: memref<16x128xf32, #tpu.memory_space<vmem>>) attributes {dimension_semantics = [#tpu.dimension_semantics<parallel>], iteration_bounds = array<i64: 1>, scalar_prefetch = 0 : i64, scratch_operands = 0 : i64, tpu.core_type = #tpu.core_type<tc>, window_params = [{transform_indices = @transform_0, window_bounds = array<i64: 16, 16>}, {pipeline_mode = #tpu.pipeline_mode<synchronous>, transform_indices = @transform_1, window_bounds = array<i64: 16, 128>}, {pipeline_mode = #tpu.pipeline_mode<synchronous>, transform_indices = @transform_2, window_bounds = array<i64: 1, 128>}, {pipeline_mode = #tpu.pipeline_mode<synchronous>, transform_indices = @transform_3, window_bounds = array<i64: 128, 128>}, {pipeline_mode = #tpu.pipeline_mode<synchronous>, transform_indices = @transform_4, window_bounds = array<i64: 1, 128>}, {pipeline_mode = #tpu.pipeline_mode<synchronous>, transform_indices = @transform_5, window_bounds = array<i64: 128, 128>}, {pipeline_mode = #tpu.pipeline_mode<synchronous>, transform_indices = @transform_6, window_bounds = array<i64: 1, 128>}, {transform_indices = @transform_7, window_bounds = array<i64: 16, 128>}]} {
    %c0 = arith.constant 0 : index
    %c0_0 = arith.constant 0 : index
    %0 = vector.load %arg1[%c0, %c0_0] : memref<16x16xbf16, #tpu.memory_space<vmem>>, vector<16x16xbf16>
    %c0_1 = arith.constant 0 : index
    %c0_2 = arith.constant 0 : index
    %1 = vector.load %arg2[%c0_1, %c0_2] : memref<16x128xbf16, #tpu.memory_space<vmem>>, vector<16x128xbf16>
    %cst = arith.constant dense<0.000000e+00> : vector<16x128xf32>
    %2 = tpu.matmul %0, %1, %cst {dimension_numbers = #tpu.dot_dimension_numbers<[1], [0], [0], [1], [0, 0, 1, 1], [], []>} : vector<16x16xbf16>, vector<16x128xbf16>, vector<16x128xf32> -> vector<16x128xf32>
    %c0_3 = arith.constant 0 : index
    %c0_4 = arith.constant 0 : index
    %3 = vector.load %arg3[%c0_3, %c0_4] : memref<1x128xf32, #tpu.memory_space<vmem>>, vector<1x128xf32>
    %4 = vector.broadcast %3 : vector<1x128xf32> to vector<16x128xf32>
    %5 = arith.addf %2, %4 : vector<16x128xf32>
    %cst_5 = arith.constant 0.000000e+00 : f32
    %6 = vector.broadcast %cst_5 : f32 to vector<16x128xf32>
    %7 = arith.cmpf ogt, %5, %6 : vector<16x128xf32>
    %cst_6 = arith.constant 0.00999999977 : f32
    %8 = vector.broadcast %cst_6 : f32 to vector<16x128xf32>
    %9 = arith.mulf %8, %5 : vector<16x128xf32>
    %10 = arith.select %7, %5, %9 : vector<16x128xi1>, vector<16x128xf32>
    %11 = arith.truncf %10 : vector<16x128xf32> to vector<16x128xbf16>
    %c0_7 = arith.constant 0 : index
    %c0_8 = arith.constant 0 : index
    %12 = vector.load %arg4[%c0_7, %c0_8] : memref<128x128xbf16, #tpu.memory_space<vmem>>, vector<128x128xbf16>
    %cst_9 = arith.constant dense<0.000000e+00> : vector<16x128xf32>
    %13 = tpu.matmul %11, %12, %cst_9 {dimension_numbers = #tpu.dot_dimension_numbers<[1], [0], [0], [1], [0, 0, 1, 1], [], []>} : vector<16x128xbf16>, vector<128x128xbf16>, vector<16x128xf32> -> vector<16x128xf32>
    %c0_10 = arith.constant 0 : index
    %c0_11 = arith.constant 0 : index
    %14 = vector.load %arg5[%c0_10, %c0_11] : memref<1x128xf32, #tpu.memory_space<vmem>>, vector<1x128xf32>
    %15 = vector.broadcast %14 : vector<1x128xf32> to vector<16x128xf32>
    %16 = arith.addf %13, %15 : vector<16x128xf32>
    %cst_12 = arith.constant 0.000000e+00 : f32
    %17 = vector.broadcast %cst_12 : f32 to vector<16x128xf32>
    %18 = arith.cmpf ogt, %16, %17 : vector<16x128xf32>
    %cst_13 = arith.constant 0.00999999977 : f32
    %19 = vector.broadcast %cst_13 : f32 to vector<16x128xf32>
    %20 = arith.mulf %19, %16 : vector<16x128xf32>
    %21 = arith.select %18, %16, %20 : vector<16x128xi1>, vector<16x128xf32>
    %22 = arith.truncf %21 : vector<16x128xf32> to vector<16x128xbf16>
    %c0_14 = arith.constant 0 : index
    %c0_15 = arith.constant 0 : index
    %23 = vector.load %arg6[%c0_14, %c0_15] : memref<128x128xbf16, #tpu.memory_space<vmem>>, vector<128x128xbf16>
    %cst_16 = arith.constant dense<0.000000e+00> : vector<16x128xf32>
    %24 = tpu.matmul %22, %23, %cst_16 {dimension_numbers = #tpu.dot_dimension_numbers<[1], [0], [0], [1], [0, 0, 1, 1], [], []>} : vector<16x128xbf16>, vector<128x128xbf16>, vector<16x128xf32> -> vector<16x128xf32>
    %c0_17 = arith.constant 0 : index
    %c0_18 = arith.constant 0 : index
    %25 = vector.load %arg7[%c0_17, %c0_18] : memref<1x128xf32, #tpu.memory_space<vmem>>, vector<1x128xf32>
    %26 = vector.broadcast %25 : vector<1x128xf32> to vector<16x128xf32>
    %27 = arith.addf %24, %26 : vector<16x128xf32>
    %cst_19 = arith.constant 0.000000e+00 : f32
    %28 = vector.broadcast %cst_19 : f32 to vector<16x128xf32>
    %29 = arith.cmpf ogt, %27, %28 : vector<16x128xf32>
    %cst_20 = arith.constant 0.00999999977 : f32
    %30 = vector.broadcast %cst_20 : f32 to vector<16x128xf32>
    %31 = arith.mulf %30, %27 : vector<16x128xf32>
    %32 = arith.select %29, %27, %31 : vector<16x128xi1>, vector<16x128xf32>
    %cst_21 = arith.constant 0.000000e+00 : f32
    %33 = vector.broadcast %cst_21 : f32 to vector<16x128xf32>
    %34 = arith.subf %33, %32 : vector<16x128xf32>
    %35 = math.exp %34 : vector<16x128xf32>
    %cst_22 = arith.constant 1.000000e+00 : f32
    %36 = vector.broadcast %cst_22 : f32 to vector<16x128xf32>
    %37 = arith.addf %36, %35 : vector<16x128xf32>
    %38 = tpu.reciprocal %37 {approx = true} : vector<16x128xf32> -> vector<16x128xf32>
    %c0_23 = arith.constant 0 : index
    %c0_24 = arith.constant 0 : index
    %39 = vector.load %arg8[%c0_23, %c0_24] : memref<16x128xf32, #tpu.memory_space<vmem>>, vector<16x128xf32>
    tpu.vector_store %arg8[%c0_23, %c0_24], %38 {strides = array<i32>} : memref<16x128xf32, #tpu.memory_space<vmem>>, vector<16x128xf32>,
    return
  }
  func.func @transform_0(%arg0: i32) -> (i32, i32) {
    %c0_i32 = arith.constant 0 : i32
    %c0_i32_0 = arith.constant 0 : i32
    return %arg0, %c0_i32 : i32, i32
  }
  func.func @transform_1(%arg0: i32) -> (i32, i32) {
    %c0_i32 = arith.constant 0 : i32
    %c0_i32_0 = arith.constant 0 : i32
    %c0_i32_1 = arith.constant 0 : i32
    return %c0_i32, %c0_i32_0 : i32, i32
  }
  func.func @transform_2(%arg0: i32) -> (i32, i32) {
    %c0_i32 = arith.constant 0 : i32
    %c0_i32_0 = arith.constant 0 : i32
    %c0_i32_1 = arith.constant 0 : i32
    return %c0_i32, %c0_i32_0 : i32, i32
  }
  func.func @transform_3(%arg0: i32) -> (i32, i32) {
    %c0_i32 = arith.constant 0 : i32
    %c0_i32_0 = arith.constant 0 : i32
    %c0_i32_1 = arith.constant 0 : i32
    return %c0_i32, %c0_i32_0 : i32, i32
  }
  func.func @transform_4(%arg0: i32) -> (i32, i32) {
    %c0_i32 = arith.constant 0 : i32
    %c0_i32_0 = arith.constant 0 : i32
    %c0_i32_1 = arith.constant 0 : i32
    return %c0_i32, %c0_i32_0 : i32, i32
  }
  func.func @transform_5(%arg0: i32) -> (i32, i32) {
    %c0_i32 = arith.constant 0 : i32
    %c0_i32_0 = arith.constant 0 : i32
    %c0_i32_1 = arith.constant 0 : i32
    return %c0_i32, %c0_i32_0 : i32, i32
  }
  func.func @transform_6(%arg0: i32) -> (i32, i32) {
    %c0_i32 = arith.constant 0 : i32
    %c0_i32_0 = arith.constant 0 : i32
    %c0_i32_1 = arith.constant 0 : i32
    return %c0_i32, %c0_i32_0 : i32, i32
  }
  func.func @transform_7(%arg0: i32) -> (i32, i32) {
    %c0_i32 = arith.constant 0 : i32
    %c0_i32_0 = arith.constant 0 : i32
    return %arg0, %c0_i32 : i32, i32
  }
}

</mosaic_0001>

<llo_original>
// kernel: tpu_custom_call.1
$region0: #{tpu_custom_call.1}
  #allocation0 [shape = 'u32[]', space=smem, size = 0x4, offset = 0x4, fixed_abs, tag = 'smem constant byte address 0x4 - core index']
  #allocation1 [shape = 'u32[144,128]{1,0:T(1,128)}', space=vmem, size = 0x12000, scoped, tag = 'internal scratch']
  %s0 = inlined_call_operand.hbm [shape: bf16[16,16], index: 0, kind: input, shape index: {}]
  %s1 = inlined_call_operand.hbm [shape: bf16[16,128], index: 1, kind: input, shape index: {}]
  %s2 = inlined_call_operand.vmem [shape: f32[1,128], index: 2, kind: input, shape index: {}]
  %s3 = inlined_call_operand.hbm [shape: bf16[128,128], index: 3, kind: input, shape index: {}]
  %s4 = inlined_call_operand.vmem [shape: f32[1,128], index: 4, kind: input, shape index: {}]
  %s5 = inlined_call_operand.hbm [shape: bf16[128,128], index: 5, kind: input, shape index: {}]
  %s6 = inlined_call_operand.vmem [shape: f32[1,128], index: 6, kind: input, shape index: {}]
  %s7 = inlined_call_operand.hbm [shape: f32[16,128], index: 7, kind: output, shape index: {}]
  %s8 = sld [smem:[#allocation0]]
  $region54: #{tpu_custom_call.1} parent=0
    _
  %s10 = ssub.s32 1, %s8
  %s11 = scalar_select 0, %s10, %s8
  $region1: #{tpu_custom_call.1} parent=0
    #allocation2 [shape = 'u8[4096]{0}', space=vmem, size = 0x1000, scoped, tag = 'input window, operand 0, single buffered']
    #allocation3 [shape = 's32[1]{0}', space=sflag, size = 0x4, scoped, tag = 'scoped memory for tpu_custom_call.1']
    #allocation4 [shape = 's32[1]{0}', space=sflag, size = 0x4, scoped, tag = 'scoped memory for tpu_custom_call.1']
    #allocation5 [shape = 'u8[4096]{0}', space=vmem, size = 0x1000, scoped, tag = 'input window, operand 1, single buffered']
    #allocation6 [shape = 's32[1]{0}', space=sflag, size = 0x4, scoped, tag = 'scoped memory for tpu_custom_call.1']
    #allocation7 [shape = 'u8[32768]{0}', space=vmem, size = 0x8000, scoped, tag = 'input window, operand 3, single buffered']
    #allocation8 [shape = 'u8[32768]{0}', space=vmem, size = 0x8000, scoped, tag = 'input window, operand 5, single buffered']
    #allocation9 [shape = 's32[1]{0}', space=sflag, size = 0x4, scoped, tag = 'scoped memory for tpu_custom_call.1']
    #allocation10 [shape = 'u8[8192]{0}', space=vmem, size = 0x2000, scoped, tag = 'output window, operand 0, single buffered']
    %12 = vsyncpa [#allocation3], 0
    %13 = vsyncpa [#allocation6], 0
    %14 = vsyncpa [#allocation9], 0
    %15 = vsyncpa [#allocation4], 0
    // Predicated region
    $region2: #{tpu_custom_call.1} parent=1 // pred_check
      _
    $region3: #{tpu_custom_call.1} parent=1 // pred_check_branch
      %17 = sbr.rel (0) target = $region5
    $region4: #{tpu_custom_call.1} parent=1 // pred_region
      %s19 = ssub.s32 128, 128
      %20 = vsyncadd [#allocation3], %s19
      %s21 = sshll.u32 [#allocation2], 4
      %s22 = int_to_ptr.vmem [resolvable:$true] %s21
      %27 = dma.hbm_to_vmem [thread:$0]  %s0, 128, %s22, [#allocation3], 64, 64, 4
    $region5: #{tpu_custom_call.1} parent=1 // pred_fallthru
      _
    // Predicated region
    $region6: #{tpu_custom_call.1} parent=1 // pred_check
      _
    $region7: #{tpu_custom_call.1} parent=1 // pred_check_branch
      %29 = sbr.rel (0) target = $region9
    $region8: #{tpu_custom_call.1} parent=1 // pred_region
      %s31 = ssub.s32 128, 128
      %32 = vsyncadd [#allocation6], %s31
      %s33 = sshll.u32 [#allocation5], 4
      %s34 = int_to_ptr.vmem [resolvable:$true] %s33
      %39 = dma.hbm_to_vmem [thread:$0]  %s1, 128, %s34, [#allocation6], 64, 64, 4
    $region9: #{tpu_custom_call.1} parent=1 // pred_fallthru
      _
    // Predicated region
    $region10: #{tpu_custom_call.1} parent=1 // pred_check
      _
    $region11: #{tpu_custom_call.1} parent=1 // pred_check_branch
      %41 = sbr.rel (0) target = $region13
    $region12: #{tpu_custom_call.1} parent=1 // pred_region
      _
    $region13: #{tpu_custom_call.1} parent=1 // pred_fallthru
      _
    // Predicated region
    $region14: #{tpu_custom_call.1} parent=1 // pred_check
      _
    $region15: #{tpu_custom_call.1} parent=1 // pred_check_branch
      %43 = sbr.rel (0) target = $region17
    $region16: #{tpu_custom_call.1} parent=1 // pred_region
      %s45 = ssub.s32 1024, 1024
      %46 = vsyncadd [#allocation6], %s45
      %s47 = sshll.u32 [#allocation7], 4
      %s48 = int_to_ptr.vmem [resolvable:$true] %s47
      %53 = dma.hbm_to_vmem [thread:$0]  %s3, 1024, %s48, [#allocation6], 64, 64, 4
    $region17: #{tpu_custom_call.1} parent=1 // pred_fallthru
      _
    // Predicated region
    $region18: #{tpu_custom_call.1} parent=1 // pred_check
      _
    $region19: #{tpu_custom_call.1} parent=1 // pred_check_branch
      %55 = sbr.rel (0) target = $region21
    $region20: #{tpu_custom_call.1} parent=1 // pred_region
      _
    $region21: #{tpu_custom_call.1} parent=1 // pred_fallthru
      _
    // Predicated region
    $region22: #{tpu_custom_call.1} parent=1 // pred_check
      _
    $region23: #{tpu_custom_call.1} parent=1 // pred_check_branch
      %57 = sbr.rel (0) target = $region25
    $region24: #{tpu_custom_call.1} parent=1 // pred_region
      %s59 = ssub.s32 1024, 1024
      %60 = vsyncadd [#allocation9], %s59
      %s61 = sshll.u32 [#allocation8], 4
      %s62 = int_to_ptr.vmem [resolvable:$true] %s61
      %67 = dma.hbm_to_vmem [thread:$0]  %s5, 1024, %s62, [#allocation9], 64, 64, 4
    $region25: #{tpu_custom_call.1} parent=1 // pred_fallthru
      _
    // Predicated region
    $region26: #{tpu_custom_call.1} parent=1 // pred_check
      _
    $region27: #{tpu_custom_call.1} parent=1 // pred_check_branch
      %69 = sbr.rel (0) target = $region29
    $region28: #{tpu_custom_call.1} parent=1 // pred_region
      _
    $region29: #{tpu_custom_call.1} parent=1 // pred_fallthru
      _
    // Predicated region
    $region30: #{tpu_custom_call.1} parent=1 // pred_check
      _
    $region31: #{tpu_custom_call.1} parent=1 // pred_check_branch
      %71 = sbr.rel (0) target = $region33
    $region32: #{tpu_custom_call.1} parent=1 // pred_region
      %72 = dma.done [#allocation3], 128
    $region33: #{tpu_custom_call.1} parent=1 // pred_fallthru
      _
    // Predicated region
    $region34: #{tpu_custom_call.1} parent=1 // pred_check
      _
    $region35: #{tpu_custom_call.1} parent=1 // pred_check_branch
      %74 = sbr.rel (0) target = $region37
    $region36: #{tpu_custom_call.1} parent=1 // pred_region
      %75 = dma.done [#allocation6], 128
    $region37: #{tpu_custom_call.1} parent=1 // pred_fallthru
      _
    // Predicated region
    $region38: #{tpu_custom_call.1} parent=1 // pred_check
      _
    $region39: #{tpu_custom_call.1} parent=1 // pred_check_branch
      %77 = sbr.rel (0) target = $region41
    $region40: #{tpu_custom_call.1} parent=1 // pred_region
      %78 = dma.done [#allocation6], 1024
    $region41: #{tpu_custom_call.1} parent=1 // pred_fallthru
      _
    // Predicated region
    $region42: #{tpu_custom_call.1} parent=1 // pred_check
      _
    $region43: #{tpu_custom_call.1} parent=1 // pred_check_branch
      %80 = sbr.rel (0) target = $region45
    $region44: #{tpu_custom_call.1} parent=1 // pred_region
      %81 = dma.done [#allocation9], 1024
    $region45: #{tpu_custom_call.1} parent=1 // pred_fallthru
      _
    %v83 = vld [vmem:[#allocation2] sm:$0xf]
    %v84 = vld [vmem:[#allocation2 + $0x4] sm:$0xf]
    %v85 = vld [vmem:[#allocation5] sm:$0xf]
    %v86 = vld [vmem:[#allocation5 + $0x4] sm:$0xf]
    %v87 = vld [vmem:[%s2] sm:$0x1]
    %v89 = vlaneseq
    %v90 = vshrl.u32 %v89, 7
    %v91 = vsub.s32 0, %v90
    %v92 = vrot.slane %v87, %v91
    %v96 = vunpack.c.l.b16 %v83
    %v97 = vunpack.c.l.b16 %v84
    %v98 = vpack.c.b16 %v97, %v96
    %v101 = vunpack.c.l.b16 %v85
    %v102 = vunpack.c.l.b16 %v86
    %v103 = vpack.c.b16 %v102, %v101
    %vm105 = vcmask 130048
    %v107 = vsel %vm105, %v98, 0
    %109 = vmatprep.subr.bf16.mxu0 0
    %110 = vmatpush1.bf16.msra.mxu0 %v103
    %111 = vmatprep.subr.bf16.mxu0 0
    %112 = vmatpush1.bf16.msra.mxu0 0
    %113 = vmatprep.subr.bf16.mxu0 0
    %114 = vmatpush1.bf16.msra.mxu0 0
    %115 = vmatprep.subr.bf16.mxu0 0
    %116 = vmatpush1.bf16.msra.mxu0 0
    %117 = vmatprep.subr.bf16.mxu0 0
    %118 = vmatpush1.bf16.msra.mxu0 0
    %119 = vmatprep.subr.bf16.mxu0 0
    %120 = vmatpush1.bf16.msra.mxu0 0
    %121 = vmatprep.subr.bf16.mxu0 0
    %122 = vmatpush1.bf16.msra.mxu0 0
    %123 = vmatprep.subr.bf16.mxu0 0
    %124 = vmatpush1.bf16.msra.mxu0 0
    %125 = vmatprep.subr.bf16.mxu0 0
    %126 = vmatpush1.bf16.msra.mxu0 0
    %127 = vmatprep.subr.bf16.mxu0 0
    %128 = vmatpush1.bf16.msra.mxu0 0
    %129 = vmatprep.subr.bf16.mxu0 0
    %130 = vmatpush1.bf16.msra.mxu0 0
    %131 = vmatprep.subr.bf16.mxu0 0
    %132 = vmatpush1.bf16.msra.mxu0 0
    %133 = vmatprep.subr.bf16.mxu0 0
    %134 = vmatpush1.bf16.msra.mxu0 0
    %135 = vmatprep.subr.bf16.mxu0 0
    %136 = vmatpush1.bf16.msra.mxu0 0
    %137 = vmatprep.subr.bf16.mxu0 0
    %138 = vmatpush1.bf16.msra.mxu0 0
    %139 = vmatprep.subr.bf16.mxu0 0
    %140 = vmatpush1.bf16.msra.mxu0 0
    %141 = vmatprep.mubr.bf16.mxu0 0
    %142 = vmatmul.mubr.bf16.gmra.mrb[0].mxu0 %v107
    %v143 = vpop.f32.mrb[0].mxu0
    %v144 = vadd.f32 %v92, %v143
    %v145 = vpop.f32.mrb[0].mxu0
    %v146 = vpop.f32.mrb[0].mxu0
    %v147 = vadd.f32 %v92, %v146
    %v148 = vpop.f32.mrb[0].mxu0
    %149 = vdwg.mxu0
    %vm150 = vcmp.gt.f32.partialorder %v144, 0.0
    %vm151 = vcmp.gt.f32.partialorder %v147, 0.0
    %v152 = vmul.f32 %v144, 0.01
    %v153 = vmul.f32 %v147, 0.01
    %v154 = vsel %vm150, %v144, %v152
    %v155 = vsel %vm151, %v147, %v153
    %v156 = vpack.c.bf16 %v155, %v154
    %v157 = vld [vmem:[#allocation7] sm:$0xf]
    %v158 = vld [vmem:[#allocation7 + $0x4] sm:$0xf]
    %v159 = vld [vmem:[#allocation7 + $0x8] sm:$0xf]
    %v160 = vld [vmem:[#allocation7 + $0xc] sm:$0xf]
    %v161 = vld [vmem:[#allocation7 + $0x10] sm:$0xf]
    %v162 = vld [vmem:[#allocation7 + $0x14] sm:$0xf]
    %v163 = vld [vmem:[#allocation7 + $0x18] sm:$0xf]
    %v164 = vld [vmem:[#allocation7 + $0x1c] sm:$0xf]
    %v165 = vld [vmem:[#allocation7 + $0x20] sm:$0xf]
    %v166 = vld [vmem:[#allocation7 + $0x24] sm:$0xf]
    %v167 = vld [vmem:[#allocation7 + $0x28] sm:$0xf]
    %v168 = vld [vmem:[#allocation7 + $0x2c] sm:$0xf]
    %v169 = vld [vmem:[#allocation7 + $0x30] sm:$0xf]
    %v170 = vld [vmem:[#allocation7 + $0x34] sm:$0xf]
    %v171 = vld [vmem:[#allocation7 + $0x38] sm:$0xf]
    %v172 = vld [vmem:[#allocation7 + $0x3c] sm:$0xf]
    %v173 = vld [vmem:[%s4] sm:$0x1]
    %v175 = vlaneseq
    %v176 = vshrl.u32 %v175, 7
    %v177 = vsub.s32 0, %v176
    %v178 = vrot.slane %v173, %v177
    %v196 = vunpack.c.l.b16 %v157
    %v197 = vunpack.c.l.b16 %v158
    %v198 = vunpack.c.l.b16 %v159
    %v199 = vunpack.c.l.b16 %v160
    %v200 = vunpack.c.l.b16 %v161
    %v201 = vunpack.c.l.b16 %v162
    %v202 = vunpack.c.l.b16 %v163
    %v203 = vunpack.c.l.b16 %v164
    %v204 = vunpack.c.l.b16 %v165
    %v205 = vunpack.c.l.b16 %v166
    %v206 = vunpack.c.l.b16 %v167
    %v207 = vunpack.c.l.b16 %v168
    %v208 = vunpack.c.l.b16 %v169
    %v209 = vunpack.c.l.b16 %v170
    %v210 = vunpack.c.l.b16 %v171
    %v211 = vunpack.c.l.b16 %v172
    %v212 = vpack.c.b16 %v197, %v196
    %v213 = vpack.c.b16 %v199, %v198
    %v214 = vpack.c.b16 %v201, %v200
    %v215 = vpack.c.b16 %v203, %v202
    %v216 = vpack.c.b16 %v205, %v204
    %v217 = vpack.c.b16 %v207, %v206
    %v218 = vpack.c.b16 %v209, %v208
    %v219 = vpack.c.b16 %v211, %v210
    %228 = vmatprep.subr.bf16.mxu0 0
    %229 = vmatpush1.bf16.msra.mxu0 %v212
    %230 = vmatprep.subr.bf16.mxu0 0
    %231 = vmatpush1.bf16.msra.mxu0 %v213
    %232 = vmatprep.subr.bf16.mxu0 0
    %233 = vmatpush1.bf16.msra.mxu0 %v214
    %234 = vmatprep.subr.bf16.mxu0 0
    %235 = vmatpush1.bf16.msra.mxu0 %v215
    %236 = vmatprep.subr.bf16.mxu0 0
    %237 = vmatpush1.bf16.msra.mxu0 %v216
    %238 = vmatprep.subr.bf16.mxu0 0
    %239 = vmatpush1.bf16.msra.mxu0 %v217
    %240 = vmatprep.subr.bf16.mxu0 0
    %241 = vmatpush1.bf16.msra.mxu0 %v218
    %242 = vmatprep.subr.bf16.mxu0 0
    %243 = vmatpush1.bf16.msra.mxu0 %v219
    %244 = vmatprep.subr.bf16.mxu0 0
    %245 = vmatpush1.bf16.msra.mxu0 0
    %246 = vmatprep.subr.bf16.mxu0 0
    %247 = vmatpush1.bf16.msra.mxu0 0
    %248 = vmatprep.subr.bf16.mxu0 0
    %249 = vmatpush1.bf16.msra.mxu0 0
    %250 = vmatprep.subr.bf16.mxu0 0
    %251 = vmatpush1.bf16.msra.mxu0 0
    %252 = vmatprep.subr.bf16.mxu0 0
    %253 = vmatpush1.bf16.msra.mxu0 0
    %254 = vmatprep.subr.bf16.mxu0 0
    %255 = vmatpush1.bf16.msra.mxu0 0
    %256 = vmatprep.subr.bf16.mxu0 0
    %257 = vmatpush1.bf16.msra.mxu0 0
    %258 = vmatprep.subr.bf16.mxu0 0
    %259 = vmatpush1.bf16.msra.mxu0 0
    %260 = vmatprep.mubr.bf16.mxu0 0
    %261 = vmatmul.mubr.bf16.gmra.mrb[0].mxu0 %v156
    %v262 = vpop.f32.mrb[0].mxu0
    %v263 = vadd.f32 %v178, %v262
    %v264 = vpop.f32.mrb[0].mxu0
    %v265 = vpop.f32.mrb[0].mxu0
    %v266 = vadd.f32 %v178, %v265
    %v267 = vpop.f32.mrb[0].mxu0
    %268 = vdwg.mxu0
    %vm269 = vcmp.gt.f32.partialorder %v263, 0.0
    %vm270 = vcmp.gt.f32.partialorder %v266, 0.0
    %v271 = vmul.f32 %v263, 0.01
    %v272 = vmul.f32 %v266, 0.01
    %v273 = vsel %vm269, %v263, %v271
    %v274 = vsel %vm270, %v266, %v272
    %v275 = vpack.c.bf16 %v274, %v273
    %v276 = vld [vmem:[#allocation8] sm:$0xf]
    %v277 = vld [vmem:[#allocation8 + $0x4] sm:$0xf]
    %v278 = vld [vmem:[#allocation8 + $0x8] sm:$0xf]
    %v279 = vld [vmem:[#allocation8 + $0xc] sm:$0xf]
    %v280 = vld [vmem:[#allocation8 + $0x10] sm:$0xf]
    %v281 = vld [vmem:[#allocation8 + $0x14] sm:$0xf]
    %v282 = vld [vmem:[#allocation8 + $0x18] sm:$0xf]
    %v283 = vld [vmem:[#allocation8 + $0x1c] sm:$0xf]
    %v284 = vld [vmem:[#allocation8 + $0x20] sm:$0xf]
    %v285 = vld [vmem:[#allocation8 + $0x24] sm:$0xf]
    %v286 = vld [vmem:[#allocation8 + $0x28] sm:$0xf]
    %v287 = vld [vmem:[#allocation8 + $0x2c] sm:$0xf]
    %v288 = vld [vmem:[#allocation8 + $0x30] sm:$0xf]
    %v289 = vld [vmem:[#allocation8 + $0x34] sm:$0xf]
    %v290 = vld [vmem:[#allocation8 + $0x38] sm:$0xf]
    %v291 = vld [vmem:[#allocation8 + $0x3c] sm:$0xf]
    %v292 = vld [vmem:[%s6] sm:$0x1]
    %v294 = vlaneseq
    %v295 = vshrl.u32 %v294, 7
    %v296 = vsub.s32 0, %v295
    %v297 = vrot.slane %v292, %v296
    %v315 = vunpack.c.l.b16 %v276
    %v316 = vunpack.c.l.b16 %v277
    %v317 = vunpack.c.l.b16 %v278
    %v318 = vunpack.c.l.b16 %v279
    %v319 = vunpack.c.l.b16 %v280
    %v320 = vunpack.c.l.b16 %v281
    %v321 = vunpack.c.l.b16 %v282
    %v322 = vunpack.c.l.b16 %v283
    %v323 = vunpack.c.l.b16 %v284
    %v324 = vunpack.c.l.b16 %v285
    %v325 = vunpack.c.l.b16 %v286
    %v326 = vunpack.c.l.b16 %v287
    %v327 = vunpack.c.l.b16 %v288
    %v328 = vunpack.c.l.b16 %v289
    %v329 = vunpack.c.l.b16 %v290
    %v330 = vunpack.c.l.b16 %v291
    %v331 = vpack.c.b16 %v316, %v315
    %v332 = vpack.c.b16 %v318, %v317
    %v333 = vpack.c.b16 %v320, %v319
    %v334 = vpack.c.b16 %v322, %v321
    %v335 = vpack.c.b16 %v324, %v323
    %v336 = vpack.c.b16 %v326, %v325
    %v337 = vpack.c.b16 %v328, %v327
    %v338 = vpack.c.b16 %v330, %v329
    %347 = vmatprep.subr.bf16.mxu0 0
    %348 = vmatpush1.bf16.msra.mxu0 %v331
    %349 = vmatprep.subr.bf16.mxu0 0
    %350 = vmatpush1.bf16.msra.mxu0 %v332
    %351 = vmatprep.subr.bf16.mxu0 0
    %352 = vmatpush1.bf16.msra.mxu0 %v333
    %353 = vmatprep.subr.bf16.mxu0 0
    %354 = vmatpush1.bf16.msra.mxu0 %v334
    %355 = vmatprep.subr.bf16.mxu0 0
    %356 = vmatpush1.bf16.msra.mxu0 %v335
    %357 = vmatprep.subr.bf16.mxu0 0
    %358 = vmatpush1.bf16.msra.mxu0 %v336
    %359 = vmatprep.subr.bf16.mxu0 0
    %360 = vmatpush1.bf16.msra.mxu0 %v337
    %361 = vmatprep.subr.bf16.mxu0 0
    %362 = vmatpush1.bf16.msra.mxu0 %v338
    %363 = vmatprep.subr.bf16.mxu0 0
    %364 = vmatpush1.bf16.msra.mxu0 0
    %365 = vmatprep.subr.bf16.mxu0 0
    %366 = vmatpush1.bf16.msra.mxu0 0
    %367 = vmatprep.subr.bf16.mxu0 0
    %368 = vmatpush1.bf16.msra.mxu0 0
    %369 = vmatprep.subr.bf16.mxu0 0
    %370 = vmatpush1.bf16.msra.mxu0 0
    %371 = vmatprep.subr.bf16.mxu0 0
    %372 = vmatpush1.bf16.msra.mxu0 0
    %373 = vmatprep.subr.bf16.mxu0 0
    %374 = vmatpush1.bf16.msra.mxu0 0
    %375 = vmatprep.subr.bf16.mxu0 0
    %376 = vmatpush1.bf16.msra.mxu0 0
    %377 = vmatprep.subr.bf16.mxu0 0
    %378 = vmatpush1.bf16.msra.mxu0 0
    %379 = vmatprep.mubr.bf16.mxu0 0
    %380 = vmatmul.mubr.bf16.gmra.mrb[0].mxu0 %v275
    %v381 = vpop.f32.mrb[0].mxu0
    %v382 = vadd.f32 %v297, %v381
    %v383 = vpop.f32.mrb[0].mxu0
    %v384 = vpop.f32.mrb[0].mxu0
    %v385 = vadd.f32 %v297, %v384
    %v386 = vpop.f32.mrb[0].mxu0
    %387 = vdwg.mxu0
    %vm388 = vcmp.gt.f32.partialorder %v382, 0.0
    %vm389 = vcmp.gt.f32.partialorder %v385, 0.0
    %v390 = vmul.f32 %v382, 0.01
    %v391 = vmul.f32 %v385, 0.01
    %v392 = vsel %vm388, %v382, %v390
    %v393 = vsel %vm389, %v385, %v391
    %v394 = vsub.f32 0.0, %v392
    %v395 = vsub.f32 0.0, %v393
    %v396 = vmul.f32 %v394, 1.442695
    %v397 = vpow.pop %v396
    %v398 = vmul.f32 %v395, 1.442695
    %v399 = vpow.pop %v398
    %v400 = vadd.f32 %v397, 1.0
    %v401 = vadd.f32 %v399, 1.0
    %v402 = vrcp.pop %v400
    %v403 = vrcp.pop %v401
    %404 = vst [vmem:[#allocation10] sm:$0xff] %v402
    %405 = vst [vmem:[#allocation10 + $0x8] sm:$0xff] %v403
    // Predicated region
    $region46: #{tpu_custom_call.1} parent=1 // pred_check
      _
    $region47: #{tpu_custom_call.1} parent=1 // pred_check_branch
      %407 = sbr.rel (0) target = $region49
    $region48: #{tpu_custom_call.1} parent=1 // pred_region
      %s409 = ssub.s32 256, 256
      %410 = vsyncadd [#allocation4], %s409
      %s411 = sshll.u32 [#allocation10], 4
      %s412 = int_to_ptr.vmem [resolvable:$true] %s411
      %417 = dma.vmem_to_hbm [thread:$0]  %s412, 256, %s7, [#allocation4], 128, 128, 8
    $region49: #{tpu_custom_call.1} parent=1 // pred_fallthru
      _
    // Predicated region
    $region50: #{tpu_custom_call.1} parent=1 // pred_check
      _
    $region51: #{tpu_custom_call.1} parent=1 // pred_check_branch
      %419 = sbr.rel (0) target = $region53
    $region52: #{tpu_custom_call.1} parent=1 // pred_region
      %420 = dma.done [#allocation4], 256
    $region53: #{tpu_custom_call.1} parent=1 // pred_fallthru
      _
    %421 = vsyncpa [#allocation3], 1
    %422 = vsyncpa [#allocation6], 1
    %423 = vsyncpa [#allocation9], 1
    %424 = vsyncpa [#allocation4], 1

</llo_original>
